<compile_context>
chip_gen: v6e
topology: v6e:2x2x1
jax: 0.10.0
libtpu: 0.0.40
codegen_flags: <defaults>
</compile_context>

<pallas_src>
import math

import numpy as np
import jax
import jax.numpy as jnp
from jax import lax
from jax.experimental import pallas as pl
from jax.experimental.pallas import tpu as pltpu

_LEAKY_SLOPE = 0.1
_LOGDET_EPS = 1e-8
_H_PAD = 128  # hidden width 75 zero-padded to a full 128-lane tile


# ----------------------------------------------------------------------------
# Fused kernel: single invocation, all T transforms iterated in-body.
# ----------------------------------------------------------------------------
def _iaf_flow_kernel(z_ref, w1_ref, b1_ref, w2_ref, b2_ref, w3_ref, b3_ref,
                     z_out_ref, ld_ref):
    T = w1_ref.shape[0]
    dim = z_ref.shape[1]

    def one_transform(t, carry):
        z, ld = carry
        # MADE: pre-masked, pre-transposed (in, out) linears + LeakyReLU(0.1).
        h = jnp.dot(z, w1_ref[t], preferred_element_type=jnp.float32) + b1_ref[t]
        h = jnp.where(h >= 0.0, h, _LEAKY_SLOPE * h)
        h = jnp.dot(h, w2_ref[t], preferred_element_type=jnp.float32) + b2_ref[t]
        h = jnp.where(h >= 0.0, h, _LEAKY_SLOPE * h)
        # Merged final layer: one dot -> [shift | scale], both halves in one vreg.
        out = jnp.dot(h, w3_ref[t], preferred_element_type=jnp.float32) + b3_ref[t]
        shift = out[:, :dim]
        scale = out[:, dim:]
        # Overflow-safe sigmoid; reciprocal maps to the EUP slot.
        e = jnp.exp(-jnp.abs(scale))
        r = pl.reciprocal(1.0 + e)               # exact; approx=True ok at looser tol
        gate = jnp.where(scale >= 0.0, r, e * r)
        z = shift + gate * (z - shift)           # == z*gate + (1-gate)*shift
        ld = ld + jnp.log(gate + _LOGDET_EPS)    # defer lane reduction to the end
        return z, ld

    z0 = z_ref[...]
    ld0 = jnp.zeros((z0.shape[0], dim), jnp.float32)
    z_fin, ld_fin = lax.fori_loop(0, T, one_transform, (z0, ld0), unroll=True)
    z_out_ref[...] = z_fin
    ld_ref[...] = jnp.sum(ld_fin, axis=-1, keepdims=True)   # single XLU reduction


# ----------------------------------------------------------------------------
# MADE mask construction (same recipe as the PyTorch module), in (in, out) layout.
# ----------------------------------------------------------------------------
def _made_masks(nin, hidden_sizes, nout, natural_ordering=False, seed=0):
    L = len(hidden_sizes)
    rng = np.random.RandomState(seed)
    m = {}
    m[-1] = np.arange(nin) if natural_ordering else rng.permutation(nin)
    for l in range(L):
        m[l] = rng.randint(m[l - 1].min(), nin - 1, size=hidden_sizes[l])
    masks = [m[l - 1][:, None] <= m[l][None, :] for l in range(L)]
    masks.append(m[L - 1][:, None] < m[-1][None, :])
    if nout > nin:
        k = int(nout / nin)
        masks[-1] = np.concatenate([masks[-1]] * k, axis=1)
    return [mm.astype(np.float32) for mm in masks]  # each (in, out)


# ----------------------------------------------------------------------------
# PropagateFlow (IAF) host-side module: parameter setup + single fused pallas_call.
# ----------------------------------------------------------------------------
class PropagateFlow:
    def __init__(self, transform, dim, num_transforms, h_sizes=(75, 75), key=None):
        if transform != "IAF":
            raise NotImplementedError("Only the IAF transform is implemented.")
        # TODO(synk): RealNVP branch of PropagateFlow is not implemented.
        self.dim = dim
        self.num_transforms = num_transforms
        self.h_sizes = list(h_sizes)
        if key is None:
            key = jax.random.PRNGKey(42)

        nin, nout = dim, 2 * dim
        hs = [nin] + self.h_sizes + [nout]
        padded = [nin] + [_H_PAD] * len(self.h_sizes) + [nout]
        # Masks are static (num_masks=1); every MADE seeds its RNG at 0, so all
        # transforms share the same masks.  Build once, fold into the weights.
        masks = [jnp.asarray(m) for m in _made_masks(nin, self.h_sizes, nout)]

        n_layers = len(hs) - 1
        w_stacks = [[] for _ in range(n_layers)]
        b_stacks = [[] for _ in range(n_layers)]
        ref_params = []
        for _ in range(num_transforms):
            layer_params = []
            for li, (h0, h1) in enumerate(zip(hs, hs[1:])):
                key, kw, kb = jax.random.split(key, 3)
                bound = 1.0 / math.sqrt(h0)   # nn.Linear kaiming-uniform bound
                # Init directly in (in, out) layout; fold the static mask in once.
                w = jax.random.uniform(kw, (h0, h1), jnp.float32, -bound, bound) * masks[li]
                b = jax.random.uniform(kb, (1, h1), jnp.float32, -bound, bound)
                layer_params.append((w, b))
                # Zero-pad to (8,128)-aligned tiles; exact math preserved.
                pw = jnp.zeros((padded[li], padded[li + 1]), jnp.float32)
                pw = pw.at[:h0, :h1].set(w)
                pb = jnp.zeros((1, padded[li + 1]), jnp.float32).at[:, :h1].set(b)
                w_stacks[li].append(pw)
                b_stacks[li].append(pb)
            ref_params.append(layer_params)

        self._ref_params = ref_params                              # unpadded, for reference
        self.w1, self.w2, self.w3 = (jnp.stack(ws) for ws in w_stacks)   # (T, in_p, out_p)
        self.b1, self.b2, self.b3 = (jnp.stack(bs) for bs in b_stacks)   # (T, 1, out_p)

    def forward(self, z):
        B, dim = z.shape
        vmem = pl.BlockSpec(memory_space=pltpu.MemorySpace.VMEM)  # full-array, VMEM-resident
        z_out, logdet = pl.pallas_call(
            _iaf_flow_kernel,
            out_shape=(jax.ShapeDtypeStruct((B, dim), jnp.float32),
                       jax.ShapeDtypeStruct((B, 1), jnp.float32)),
            in_specs=[vmem] * 7,
            out_specs=(vmem, vmem),
        )(z, self.w1, self.b1, self.w2, self.b2, self.w3, self.b3)
        return z_out, logdet[:, 0]

    __call__ = forward

    # Pure-JAX reference (no Pallas, unpadded weights) for correctness checking.
    def reference(self, z):
        logdet = jnp.zeros((z.shape[0],), jnp.float32)
        for layers in self._ref_params:
            (w1, b1), (w2, b2), (w3, b3) = layers
            h = z @ w1 + b1
            h = jnp.where(h >= 0.0, h, _LEAKY_SLOPE * h)
            h = h @ w2 + b2
            h = jnp.where(h >= 0.0, h, _LEAKY_SLOPE * h)
            out = h @ w3 + b3
            shift, scale = out[:, :self.dim], out[:, self.dim:]
            gate = jax.nn.sigmoid(scale)
            z = z * gate + (1.0 - gate) * shift
            logdet = logdet + jnp.sum(jnp.log(gate + _LOGDET_EPS), axis=-1)
        return z, logdet


if __name__ == "__main__":
    dim = 8
    num_transforms = 3
    batch = 8   # sublane-aligned batch (perf review: B >= 8)

    key = jax.random.PRNGKey(0)
    kparams, kx = jax.random.split(key)

    flow = PropagateFlow("IAF", dim, num_transforms, h_sizes=(75, 75), key=kparams)
    z0 = jax.random.normal(kx, (batch, dim), jnp.float32)

    z_out, logdet = flow(z0)
    z_out = jax.block_until_ready(z_out)
    logdet = jax.block_until_ready(logdet)

    z_ref, ld_ref = flow.reference(z0)
    np.testing.assert_allclose(np.asarray(z_out), np.asarray(z_ref),
                               rtol=1e-3, atol=1e-3)
    np.testing.assert_allclose(np.asarray(logdet), np.asarray(ld_ref),
                               rtol=1e-3, atol=1e-3)

    assert z_out.shape == (batch, dim)
    assert logdet.shape == (batch,)
    print("KERNEL_OK")
</pallas_src>

<mosaic_0001>
module attributes {stable_mosaic.version = 11 : i64} {
  func.func @_iaf_flow_kernel(%arg0: memref<8x8xf32, #tpu.memory_space<vmem>>, %arg1: memref<3x8x128xf32, #tpu.memory_space<vmem>>, %arg2: memref<3x1x128xf32, #tpu.memory_space<vmem>>, %arg3: memref<3x128x128xf32, #tpu.memory_space<vmem>>, %arg4: memref<3x1x128xf32, #tpu.memory_space<vmem>>, %arg5: memref<3x128x16xf32, #tpu.memory_space<vmem>>, %arg6: memref<3x1x16xf32, #tpu.memory_space<vmem>>, %arg7: memref<8x8xf32, #tpu.memory_space<vmem>>, %arg8: memref<8x1xf32, #tpu.memory_space<vmem>>) attributes {dimension_semantics = [], scalar_prefetch = 0 : i64, scratch_operands = 0 : i64, tpu.core_type = #tpu.core_type<tc>} {
    %c0 = arith.constant 0 : index
    %c0_0 = arith.constant 0 : index
    %0 = vector.load %arg0[%c0, %c0_0] : memref<8x8xf32, #tpu.memory_space<vmem>>, vector<8x8xf32>
    %cst = arith.constant 0.000000e+00 : f32
    %1 = vector.broadcast %cst : f32 to vector<8x8xf32>
    %c0_i32 = arith.constant 0 : i32
    %2 = arith.index_cast %c0_i32 : i32 to index
    %c0_1 = arith.constant 0 : index
    %c0_2 = arith.constant 0 : index
    %3 = vector.load %arg1[%2, %c0_1, %c0_2] : memref<3x8x128xf32, #tpu.memory_space<vmem>>, vector<1x8x128xf32>
    %4 = vector.shape_cast %3 : vector<1x8x128xf32> to vector<8x128xf32>
    %cst_3 = arith.constant dense<0.000000e+00> : vector<8x128xf32>
    %5 = tpu.matmul %0, %4, %cst_3 {dimension_numbers = #tpu.dot_dimension_numbers<[1], [0], [0], [1], [0, 0, 1, 1], [], []>} : vector<8x8xf32>, vector<8x128xf32>, vector<8x128xf32> -> vector<8x128xf32>
    %6 = arith.index_cast %c0_i32 : i32 to index
    %c0_4 = arith.constant 0 : index
    %c0_5 = arith.constant 0 : index
    %7 = vector.load %arg2[%6, %c0_4, %c0_5] : memref<3x1x128xf32, #tpu.memory_space<vmem>>, vector<1x1x128xf32>
    %8 = vector.shape_cast %7 : vector<1x1x128xf32> to vector<1x128xf32>
    %9 = vector.broadcast %8 : vector<1x128xf32> to vector<8x128xf32>
    %10 = arith.addf %5, %9 : vector<8x128xf32>
    %cst_6 = arith.constant 0.000000e+00 : f32
    %11 = vector.broadcast %cst_6 : f32 to vector<8x128xf32>
    %12 = arith.cmpf oge, %10, %11 : vector<8x128xf32>
    %cst_7 = arith.constant 1.000000e-01 : f32
    %13 = vector.broadcast %cst_7 : f32 to vector<8x128xf32>
    %14 = arith.mulf %13, %10 : vector<8x128xf32>
    %15 = arith.select %12, %10, %14 : vector<8x128xi1>, vector<8x128xf32>
    %16 = arith.index_cast %c0_i32 : i32 to index
    %c0_8 = arith.constant 0 : index
    %c0_9 = arith.constant 0 : index
    %17 = vector.load %arg3[%16, %c0_8, %c0_9] : memref<3x128x128xf32, #tpu.memory_space<vmem>>, vector<1x128x128xf32>
    %18 = vector.shape_cast %17 : vector<1x128x128xf32> to vector<128x128xf32>
    %cst_10 = arith.constant dense<0.000000e+00> : vector<8x128xf32>
    %19 = tpu.matmul %15, %18, %cst_10 {dimension_numbers = #tpu.dot_dimension_numbers<[1], [0], [0], [1], [0, 0, 1, 1], [], []>} : vector<8x128xf32>, vector<128x128xf32>, vector<8x128xf32> -> vector<8x128xf32>
    %20 = arith.index_cast %c0_i32 : i32 to index
    %c0_11 = arith.constant 0 : index
    %c0_12 = arith.constant 0 : index
    %21 = vector.load %arg4[%20, %c0_11, %c0_12] : memref<3x1x128xf32, #tpu.memory_space<vmem>>, vector<1x1x128xf32>
    %22 = vector.shape_cast %21 : vector<1x1x128xf32> to vector<1x128xf32>
    %23 = vector.broadcast %22 : vector<1x128xf32> to vector<8x128xf32>
    %24 = arith.addf %19, %23 : vector<8x128xf32>
    %cst_13 = arith.constant 0.000000e+00 : f32
    %25 = vector.broadcast %cst_13 : f32 to vector<8x128xf32>
    %26 = arith.cmpf oge, %24, %25 : vector<8x128xf32>
    %cst_14 = arith.constant 1.000000e-01 : f32
    %27 = vector.broadcast %cst_14 : f32 to vector<8x128xf32>
    %28 = arith.mulf %27, %24 : vector<8x128xf32>
    %29 = arith.select %26, %24, %28 : vector<8x128xi1>, vector<8x128xf32>
    %30 = arith.index_cast %c0_i32 : i32 to index
    %c0_15 = arith.constant 0 : index
    %c0_16 = arith.constant 0 : index
    %31 = vector.load %arg5[%30, %c0_15, %c0_16] : memref<3x128x16xf32, #tpu.memory_space<vmem>>, vector<1x128x16xf32>
    %32 = vector.shape_cast %31 : vector<1x128x16xf32> to vector<128x16xf32>
    %cst_17 = arith.constant dense<0.000000e+00> : vector<8x16xf32>
    %33 = tpu.matmul %29, %32, %cst_17 {dimension_numbers = #tpu.dot_dimension_numbers<[1], [0], [0], [1], [0, 0, 1, 1], [], []>} : vector<8x128xf32>, vector<128x16xf32>, vector<8x16xf32> -> vector<8x16xf32>
    %34 = arith.index_cast %c0_i32 : i32 to index
    %c0_18 = arith.constant 0 : index
    %c0_19 = arith.constant 0 : index
    %35 = vector.load %arg6[%34, %c0_18, %c0_19] : memref<3x1x16xf32, #tpu.memory_space<vmem>>, vector<1x1x16xf32>
    %36 = vector.shape_cast %35 : vector<1x1x16xf32> to vector<1x16xf32>
    %37 = vector.broadcast %36 : vector<1x16xf32> to vector<8x16xf32>
    %38 = arith.addf %33, %37 : vector<8x16xf32>
    %39 = vector.extract_strided_slice %38 {offsets = [0, 0], sizes = [8, 8], strides = [1, 1]} : vector<8x16xf32> to vector<8x8xf32>
    %40 = vector.extract_strided_slice %38 {offsets = [0, 8], sizes = [8, 8], strides = [1, 1]} : vector<8x16xf32> to vector<8x8xf32>
    %41 = math.absf %40 : vector<8x8xf32>
    %cst_20 = arith.constant 0.000000e+00 : f32
    %42 = vector.broadcast %cst_20 : f32 to vector<8x8xf32>
    %43 = arith.subf %42, %41 : vector<8x8xf32>
    %44 = math.exp %43 : vector<8x8xf32>
    %cst_21 = arith.constant 1.000000e+00 : f32
    %45 = vector.broadcast %cst_21 : f32 to vector<8x8xf32>
    %46 = arith.addf %45, %44 : vector<8x8xf32>
    %47 = tpu.reciprocal %46 : vector<8x8xf32> -> vector<8x8xf32>
    %cst_22 = arith.constant 0.000000e+00 : f32
    %48 = vector.broadcast %cst_22 : f32 to vector<8x8xf32>
    %49 = arith.cmpf oge, %40, %48 : vector<8x8xf32>
    %50 = arith.mulf %44, %47 : vector<8x8xf32>
    %51 = arith.select %49, %47, %50 : vector<8x8xi1>, vector<8x8xf32>
    %52 = arith.subf %0, %39 : vector<8x8xf32>
    %53 = arith.mulf %51, %52 : vector<8x8xf32>
    %54 = arith.addf %39, %53 : vector<8x8xf32>
    %cst_23 = arith.constant 9.99999993E-9 : f32
    %55 = vector.broadcast %cst_23 : f32 to vector<8x8xf32>
    %56 = arith.addf %51, %55 : vector<8x8xf32>
    %57 = math.log %56 : vector<8x8xf32>
    %58 = arith.addf %1, %57 : vector<8x8xf32>
    %c1_i32 = arith.constant 1 : i32
    %59 = arith.index_cast %c1_i32 : i32 to index
    %c0_24 = arith.constant 0 : index
    %c0_25 = arith.constant 0 : index
    %60 = vector.load %arg1[%59, %c0_24, %c0_25] : memref<3x8x128xf32, #tpu.memory_space<vmem>>, vector<1x8x128xf32>
    %61 = vector.shape_cast %60 : vector<1x8x128xf32> to vector<8x128xf32>
    %cst_26 = arith.constant dense<0.000000e+00> : vector<8x128xf32>
    %62 = tpu.matmul %54, %61, %cst_26 {dimension_numbers = #tpu.dot_dimension_numbers<[1], [0], [0], [1], [0, 0, 1, 1], [], []>} : vector<8x8xf32>, vector<8x128xf32>, vector<8x128xf32> -> vector<8x128xf32>
    %63 = arith.index_cast %c1_i32 : i32 to index
    %c0_27 = arith.constant 0 : index
    %c0_28 = arith.constant 0 : index
    %64 = vector.load %arg2[%63, %c0_27, %c0_28] : memref<3x1x128xf32, #tpu.memory_space<vmem>>, vector<1x1x128xf32>
    %65 = vector.shape_cast %64 : vector<1x1x128xf32> to vector<1x128xf32>
    %66 = vector.broadcast %65 : vector<1x128xf32> to vector<8x128xf32>
    %67 = arith.addf %62, %66 : vector<8x128xf32>
    %cst_29 = arith.constant 0.000000e+00 : f32
    %68 = vector.broadcast %cst_29 : f32 to vector<8x128xf32>
    %69 = arith.cmpf oge, %67, %68 : vector<8x128xf32>
    %cst_30 = arith.constant 1.000000e-01 : f32
    %70 = vector.broadcast %cst_30 : f32 to vector<8x128xf32>
    %71 = arith.mulf %70, %67 : vector<8x128xf32>
    %72 = arith.select %69, %67, %71 : vector<8x128xi1>, vector<8x128xf32>
    %73 = arith.index_cast %c1_i32 : i32 to index
    %c0_31 = arith.constant 0 : index
    %c0_32 = arith.constant 0 : index
    %74 = vector.load %arg3[%73, %c0_31, %c0_32] : memref<3x128x128xf32, #tpu.memory_space<vmem>>, vector<1x128x128xf32>
    %75 = vector.shape_cast %74 : vector<1x128x128xf32> to vector<128x128xf32>
    %cst_33 = arith.constant dense<0.000000e+00> : vector<8x128xf32>
    %76 = tpu.matmul %72, %75, %cst_33 {dimension_numbers = #tpu.dot_dimension_numbers<[1], [0], [0], [1], [0, 0, 1, 1], [], []>} : vector<8x128xf32>, vector<128x128xf32>, vector<8x128xf32> -> vector<8x128xf32>
    %77 = arith.index_cast %c1_i32 : i32 to index
    %c0_34 = arith.constant 0 : index
    %c0_35 = arith.constant 0 : index
    %78 = vector.load %arg4[%77, %c0_34, %c0_35] : memref<3x1x128xf32, #tpu.memory_space<vmem>>, vector<1x1x128xf32>
    %79 = vector.shape_cast %78 : vector<1x1x128xf32> to vector<1x128xf32>
    %80 = vector.broadcast %79 : vector<1x128xf32> to vector<8x128xf32>
    %81 = arith.addf %76, %80 : vector<8x128xf32>
    %cst_36 = arith.constant 0.000000e+00 : f32
    %82 = vector.broadcast %cst_36 : f32 to vector<8x128xf32>
    %83 = arith.cmpf oge, %81, %82 : vector<8x128xf32>
    %cst_37 = arith.constant 1.000000e-01 : f32
    %84 = vector.broadcast %cst_37 : f32 to vector<8x128xf32>
    %85 = arith.mulf %84, %81 : vector<8x128xf32>
    %86 = arith.select %83, %81, %85 : vector<8x128xi1>, vector<8x128xf32>
    %87 = arith.index_cast %c1_i32 : i32 to index
    %c0_38 = arith.constant 0 : index
    %c0_39 = arith.constant 0 : index
    %88 = vector.load %arg5[%87, %c0_38, %c0_39] : memref<3x128x16xf32, #tpu.memory_space<vmem>>, vector<1x128x16xf32>
    %89 = vector.shape_cast %88 : vector<1x128x16xf32> to vector<128x16xf32>
    %cst_40 = arith.constant dense<0.000000e+00> : vector<8x16xf32>
    %90 = tpu.matmul %86, %89, %cst_40 {dimension_numbers = #tpu.dot_dimension_numbers<[1], [0], [0], [1], [0, 0, 1, 1], [], []>} : vector<8x128xf32>, vector<128x16xf32>, vector<8x16xf32> -> vector<8x16xf32>
    %91 = arith.index_cast %c1_i32 : i32 to index
    %c0_41 = arith.constant 0 : index
    %c0_42 = arith.constant 0 : index
    %92 = vector.load %arg6[%91, %c0_41, %c0_42] : memref<3x1x16xf32, #tpu.memory_space<vmem>>, vector<1x1x16xf32>
    %93 = vector.shape_cast %92 : vector<1x1x16xf32> to vector<1x16xf32>
    %94 = vector.broadcast %93 : vector<1x16xf32> to vector<8x16xf32>
    %95 = arith.addf %90, %94 : vector<8x16xf32>
    %96 = vector.extract_strided_slice %95 {offsets = [0, 0], sizes = [8, 8], strides = [1, 1]} : vector<8x16xf32> to vector<8x8xf32>
    %97 = vector.extract_strided_slice %95 {offsets = [0, 8], sizes = [8, 8], strides = [1, 1]} : vector<8x16xf32> to vector<8x8xf32>
    %98 = math.absf %97 : vector<8x8xf32>
    %cst_43 = arith.constant 0.000000e+00 : f32
    %99 = vector.broadcast %cst_43 : f32 to vector<8x8xf32>
    %100 = arith.subf %99, %98 : vector<8x8xf32>
    %101 = math.exp %100 : vector<8x8xf32>
    %cst_44 = arith.constant 1.000000e+00 : f32
    %102 = vector.broadcast %cst_44 : f32 to vector<8x8xf32>
    %103 = arith.addf %102, %101 : vector<8x8xf32>
    %104 = tpu.reciprocal %103 : vector<8x8xf32> -> vector<8x8xf32>
    %cst_45 = arith.constant 0.000000e+00 : f32
    %105 = vector.broadcast %cst_45 : f32 to vector<8x8xf32>
    %106 = arith.cmpf oge, %97, %105 : vector<8x8xf32>
    %107 = arith.mulf %101, %104 : vector<8x8xf32>
    %108 = arith.select %106, %104, %107 : vector<8x8xi1>, vector<8x8xf32>
    %109 = arith.subf %54, %96 : vector<8x8xf32>
    %110 = arith.mulf %108, %109 : vector<8x8xf32>
    %111 = arith.addf %96, %110 : vector<8x8xf32>
    %cst_46 = arith.constant 9.99999993E-9 : f32
    %112 = vector.broadcast %cst_46 : f32 to vector<8x8xf32>
    %113 = arith.addf %108, %112 : vector<8x8xf32>
    %114 = math.log %113 : vector<8x8xf32>
    %115 = arith.addf %58, %114 : vector<8x8xf32>
    %c2_i32 = arith.constant 2 : i32
    %116 = arith.index_cast %c2_i32 : i32 to index
    %c0_47 = arith.constant 0 : index
    %c0_48 = arith.constant 0 : index
    %117 = vector.load %arg1[%116, %c0_47, %c0_48] : memref<3x8x128xf32, #tpu.memory_space<vmem>>, vector<1x8x128xf32>
    %118 = vector.shape_cast %117 : vector<1x8x128xf32> to vector<8x128xf32>
    %cst_49 = arith.constant dense<0.000000e+00> : vector<8x128xf32>
    %119 = tpu.matmul %111, %118, %cst_49 {dimension_numbers = #tpu.dot_dimension_numbers<[1], [0], [0], [1], [0, 0, 1, 1], [], []>} : vector<8x8xf32>, vector<8x128xf32>, vector<8x128xf32> -> vector<8x128xf32>
    %120 = arith.index_cast %c2_i32 : i32 to index
    %c0_50 = arith.constant 0 : index
    %c0_51 = arith.constant 0 : index
    %121 = vector.load %arg2[%120, %c0_50, %c0_51] : memref<3x1x128xf32, #tpu.memory_space<vmem>>, vector<1x1x128xf32>
    %122 = vector.shape_cast %121 : vector<1x1x128xf32> to vector<1x128xf32>
    %123 = vector.broadcast %122 : vector<1x128xf32> to vector<8x128xf32>
    %124 = arith.addf %119, %123 : vector<8x128xf32>
    %cst_52 = arith.constant 0.000000e+00 : f32
    %125 = vector.broadcast %cst_52 : f32 to vector<8x128xf32>
    %126 = arith.cmpf oge, %124, %125 : vector<8x128xf32>
    %cst_53 = arith.constant 1.000000e-01 : f32
    %127 = vector.broadcast %cst_53 : f32 to vector<8x128xf32>
    %128 = arith.mulf %127, %124 : vector<8x128xf32>
    %129 = arith.select %126, %124, %128 : vector<8x128xi1>, vector<8x128xf32>
    %130 = arith.index_cast %c2_i32 : i32 to index
    %c0_54 = arith.constant 0 : index
    %c0_55 = arith.constant 0 : index
    %131 = vector.load %arg3[%130, %c0_54, %c0_55] : memref<3x128x128xf32, #tpu.memory_space<vmem>>, vector<1x128x128xf32>
    %132 = vector.shape_cast %131 : vector<1x128x128xf32> to vector<128x128xf32>
    %cst_56 = arith.constant dense<0.000000e+00> : vector<8x128xf32>
    %133 = tpu.matmul %129, %132, %cst_56 {dimension_numbers = #tpu.dot_dimension_numbers<[1], [0], [0], [1], [0, 0, 1, 1], [], []>} : vector<8x128xf32>, vector<128x128xf32>, vector<8x128xf32> -> vector<8x128xf32>
    %134 = arith.index_cast %c2_i32 : i32 to index
    %c0_57 = arith.constant 0 : index
    %c0_58 = arith.constant 0 : index
    %135 = vector.load %arg4[%134, %c0_57, %c0_58] : memref<3x1x128xf32, #tpu.memory_space<vmem>>, vector<1x1x128xf32>
    %136 = vector.shape_cast %135 : vector<1x1x128xf32> to vector<1x128xf32>
    %137 = vector.broadcast %136 : vector<1x128xf32> to vector<8x128xf32>
    %138 = arith.addf %133, %137 : vector<8x128xf32>
    %cst_59 = arith.constant 0.000000e+00 : f32
    %139 = vector.broadcast %cst_59 : f32 to vector<8x128xf32>
    %140 = arith.cmpf oge, %138, %139 : vector<8x128xf32>
    %cst_60 = arith.constant 1.000000e-01 : f32
    %141 = vector.broadcast %cst_60 : f32 to vector<8x128xf32>
    %142 = arith.mulf %141, %138 : vector<8x128xf32>
    %143 = arith.select %140, %138, %142 : vector<8x128xi1>, vector<8x128xf32>
    %144 = arith.index_cast %c2_i32 : i32 to index
    %c0_61 = arith.constant 0 : index
    %c0_62 = arith.constant 0 : index
    %145 = vector.load %arg5[%144, %c0_61, %c0_62] : memref<3x128x16xf32, #tpu.memory_space<vmem>>, vector<1x128x16xf32>
    %146 = vector.shape_cast %145 : vector<1x128x16xf32> to vector<128x16xf32>
    %cst_63 = arith.constant dense<0.000000e+00> : vector<8x16xf32>
    %147 = tpu.matmul %143, %146, %cst_63 {dimension_numbers = #tpu.dot_dimension_numbers<[1], [0], [0], [1], [0, 0, 1, 1], [], []>} : vector<8x128xf32>, vector<128x16xf32>, vector<8x16xf32> -> vector<8x16xf32>
    %148 = arith.index_cast %c2_i32 : i32 to index
    %c0_64 = arith.constant 0 : index
    %c0_65 = arith.constant 0 : index
    %149 = vector.load %arg6[%148, %c0_64, %c0_65] : memref<3x1x16xf32, #tpu.memory_space<vmem>>, vector<1x1x16xf32>
    %150 = vector.shape_cast %149 : vector<1x1x16xf32> to vector<1x16xf32>
    %151 = vector.broadcast %150 : vector<1x16xf32> to vector<8x16xf32>
    %152 = arith.addf %147, %151 : vector<8x16xf32>
    %153 = vector.extract_strided_slice %152 {offsets = [0, 0], sizes = [8, 8], strides = [1, 1]} : vector<8x16xf32> to vector<8x8xf32>
    %154 = vector.extract_strided_slice %152 {offsets = [0, 8], sizes = [8, 8], strides = [1, 1]} : vector<8x16xf32> to vector<8x8xf32>
    %155 = math.absf %154 : vector<8x8xf32>
    %cst_66 = arith.constant 0.000000e+00 : f32
    %156 = vector.broadcast %cst_66 : f32 to vector<8x8xf32>
    %157 = arith.subf %156, %155 : vector<8x8xf32>
    %158 = math.exp %157 : vector<8x8xf32>
    %cst_67 = arith.constant 1.000000e+00 : f32
    %159 = vector.broadcast %cst_67 : f32 to vector<8x8xf32>
    %160 = arith.addf %159, %158 : vector<8x8xf32>
    %161 = tpu.reciprocal %160 : vector<8x8xf32> -> vector<8x8xf32>
    %cst_68 = arith.constant 0.000000e+00 : f32
    %162 = vector.broadcast %cst_68 : f32 to vector<8x8xf32>
    %163 = arith.cmpf oge, %154, %162 : vector<8x8xf32>
    %164 = arith.mulf %158, %161 : vector<8x8xf32>
    %165 = arith.select %163, %161, %164 : vector<8x8xi1>, vector<8x8xf32>
    %166 = arith.subf %111, %153 : vector<8x8xf32>
    %167 = arith.mulf %165, %166 : vector<8x8xf32>
    %168 = arith.addf %153, %167 : vector<8x8xf32>
    %cst_69 = arith.constant 9.99999993E-9 : f32
    %169 = vector.broadcast %cst_69 : f32 to vector<8x8xf32>
    %170 = arith.addf %165, %169 : vector<8x8xf32>
    %171 = math.log %170 : vector<8x8xf32>
    %172 = arith.addf %115, %171 : vector<8x8xf32>
    %c3_i32 = arith.constant 3 : i32
    %c0_70 = arith.constant 0 : index
    %c0_71 = arith.constant 0 : index
    %173 = vector.load %arg7[%c0_70, %c0_71] : memref<8x8xf32, #tpu.memory_space<vmem>>, vector<8x8xf32>
    tpu.vector_store %arg7[%c0_70, %c0_71], %168 {strides = array<i32>} : memref<8x8xf32, #tpu.memory_space<vmem>>, vector<8x8xf32>,
    %cst_72 = arith.constant dense<0.000000e+00> : vector<8xf32>
    %174 = vector.multi_reduction <add>, %172, %cst_72 [1] : vector<8x8xf32> to vector<8xf32>
    %175 = vector.shape_cast %174 : vector<8xf32> to vector<8x1xf32>
    %c0_73 = arith.constant 0 : index
    %c0_74 = arith.constant 0 : index
    %176 = vector.load %arg8[%c0_73, %c0_74] : memref<8x1xf32, #tpu.memory_space<vmem>>, vector<8x1xf32>
    tpu.vector_store %arg8[%c0_73, %c0_74], %175 {strides = array<i32>} : memref<8x1xf32, #tpu.memory_space<vmem>>, vector<8x1xf32>,
    return
  }
}

</mosaic_0001>

<llo_original>
// kernel: tpu_custom_call.1
$region0: #{tpu_custom_call.1}
  #allocation0 [shape = 'u32[]', space=smem, size = 0x4, offset = 0x4, fixed_abs, tag = 'smem constant byte address 0x4 - core index']
  #allocation1 [shape = 'u32[144,128]{1,0:T(1,128)}', space=vmem, size = 0x12000, scoped, tag = 'internal scratch']
  %s0 = inlined_call_operand.vmem [shape: f32[8,8], index: 0, kind: input, shape index: {}]
  %s1 = inlined_call_operand.vmem [shape: f32[3,8,128], index: 1, kind: input, shape index: {}]
  %s2 = inlined_call_operand.vmem [shape: f32[3,1,128], index: 2, kind: input, shape index: {}]
  %s3 = inlined_call_operand.vmem [shape: f32[3,128,128], index: 3, kind: input, shape index: {}]
  %s4 = inlined_call_operand.vmem [shape: f32[3,1,128], index: 4, kind: input, shape index: {}]
  %s5 = inlined_call_operand.vmem [shape: f32[3,128,16], index: 5, kind: input, shape index: {}]
  %s6 = inlined_call_operand.vmem [shape: f32[3,1,16], index: 6, kind: input, shape index: {}]
  %s7 = inlined_call_operand.hbm [shape: f32[8,8], index: 7, kind: output, shape index: {0}]
  %s8 = inlined_call_operand.vmem [shape: f32[8,1], index: 8, kind: output, shape index: {1}]
  %9 = xla_tuple %s7, %s8
  %s10 = sld [smem:[#allocation0]]
  $region46: #{tpu_custom_call.1} parent=0
    _
  %s12 = ssub.s32 1, %s10
  %s13 = scalar_select 0, %s12, %s10
  $region1: #{tpu_custom_call.1} parent=0
    #allocation2 [shape = 'u8[4096]{0}', space=vmem, size = 0x1000, scoped, tag = 'output window, operand 0, single buffered']
    #allocation3 [shape = 's32[1]{0}', space=sflag, size = 0x4, scoped, tag = 'scoped memory for tpu_custom_call.1']
    %14 = vsyncpa [#allocation3], 0
    // Predicated region
    $region2: #{tpu_custom_call.1} parent=1 // pred_check
      _
    $region3: #{tpu_custom_call.1} parent=1 // pred_check_branch
      %16 = sbr.rel (0) target = $region5
    $region4: #{tpu_custom_call.1} parent=1 // pred_region
      _
    $region5: #{tpu_custom_call.1} parent=1 // pred_fallthru
      _
    // Predicated region
    $region6: #{tpu_custom_call.1} parent=1 // pred_check
      _
    $region7: #{tpu_custom_call.1} parent=1 // pred_check_branch
      %18 = sbr.rel (0) target = $region9
    $region8: #{tpu_custom_call.1} parent=1 // pred_region
      _
    $region9: #{tpu_custom_call.1} parent=1 // pred_fallthru
      _
    // Predicated region
    $region10: #{tpu_custom_call.1} parent=1 // pred_check
      _
    $region11: #{tpu_custom_call.1} parent=1 // pred_check_branch
      %20 = sbr.rel (0) target = $region13
    $region12: #{tpu_custom_call.1} parent=1 // pred_region
      _
    $region13: #{tpu_custom_call.1} parent=1 // pred_fallthru
      _
    // Predicated region
    $region14: #{tpu_custom_call.1} parent=1 // pred_check
      _
    $region15: #{tpu_custom_call.1} parent=1 // pred_check_branch
      %22 = sbr.rel (0) target = $region17
    $region16: #{tpu_custom_call.1} parent=1 // pred_region
      _
    $region17: #{tpu_custom_call.1} parent=1 // pred_fallthru
      _
    // Predicated region
    $region18: #{tpu_custom_call.1} parent=1 // pred_check
      _
    $region19: #{tpu_custom_call.1} parent=1 // pred_check_branch
      %24 = sbr.rel (0) target = $region21
    $region20: #{tpu_custom_call.1} parent=1 // pred_region
      _
    $region21: #{tpu_custom_call.1} parent=1 // pred_fallthru
      _
    // Predicated region
    $region22: #{tpu_custom_call.1} parent=1 // pred_check
      _
    $region23: #{tpu_custom_call.1} parent=1 // pred_check_branch
      %26 = sbr.rel (0) target = $region25
    $region24: #{tpu_custom_call.1} parent=1 // pred_region
      _
    $region25: #{tpu_custom_call.1} parent=1 // pred_fallthru
      _
    // Predicated region
    $region26: #{tpu_custom_call.1} parent=1 // pred_check
      _
    $region27: #{tpu_custom_call.1} parent=1 // pred_check_branch
      %28 = sbr.rel (0) target = $region29
    $region28: #{tpu_custom_call.1} parent=1 // pred_region
      _
    $region29: #{tpu_custom_call.1} parent=1 // pred_fallthru
      _
    %v29 = vld [vmem:[%s0] sm:$0xff]
    %v30 = vld [vmem:[%s1] sm:$0xff]
    %v31 = vld [vmem:[%s2] sm:$0x1]
    %v33 = vlaneseq
    %v34 = vshrl.u32 %v33, 7
    %v35 = vsub.s32 0, %v34
    %v36 = vrot.slane %v31, %v35
    %vm38 = vcmask 64512
    %v40 = vsel %vm38, %v29, 0
    %42 = vmatprep.subr.mxu0 0.0
    %43 = vmatpush1.msra.mxu0 0.0
    %44 = vmatprep.subr.mxu0 0.0
    %45 = vmatpush1.msra.mxu0 0.0
    %46 = vmatprep.subr.mxu0 0.0
    %47 = vmatpush1.msra.mxu0 0.0
    %48 = vmatprep.subr.mxu0 0.0
    %49 = vmatpush1.msra.mxu0 0.0
    %50 = vmatprep.subr.mxu0 0.0
    %51 = vmatpush1.msra.mxu0 0.0
    %52 = vmatprep.subr.mxu0 0.0
    %53 = vmatpush1.msra.mxu0 0.0
    %54 = vmatprep.subr.mxu0 0.0
    %55 = vmatpush1.msra.mxu0 0.0
    %56 = vmatprep.subr.mxu0 0.0
    %57 = vmatpush1.msra.mxu0 0.0
    %58 = vmatprep.subr.mxu0 0.0
    %59 = vmatpush1.msra.mxu0 0.0
    %60 = vmatprep.subr.mxu0 0.0
    %61 = vmatpush1.msra.mxu0 0.0
    %62 = vmatprep.subr.mxu0 0.0
    %63 = vmatpush1.msra.mxu0 0.0
    %64 = vmatprep.subr.mxu0 0.0
    %65 = vmatpush1.msra.mxu0 0.0
    %66 = vmatprep.subr.mxu0 0.0
    %67 = vmatpush1.msra.mxu0 0.0
    %68 = vmatprep.subr.mxu0 0.0
    %69 = vmatpush1.msra.mxu0 0.0
    %70 = vmatprep.subr.mxu0 0.0
    %71 = vmatpush1.msra.mxu0 0.0
    %72 = vmatprep.subr.mxu0 0.0
    %73 = vmatpush1.msra.mxu0 %v30
    %74 = vmatprep.subr.mxu0 0.0
    %75 = vmatpush2.msra.mxu0 0.0
    %76 = vmatprep.subr.mxu0 0.0
    %77 = vmatpush2.msra.mxu0 0.0
    %78 = vmatprep.subr.mxu0 0.0
    %79 = vmatpush2.msra.mxu0 0.0
    %80 = vmatprep.subr.mxu0 0.0
    %81 = vmatpush2.msra.mxu0 0.0
    %82 = vmatprep.subr.mxu0 0.0
    %83 = vmatpush2.msra.mxu0 0.0
    %84 = vmatprep.subr.mxu0 0.0
    %85 = vmatpush2.msra.mxu0 0.0
    %86 = vmatprep.subr.mxu0 0.0
    %87 = vmatpush2.msra.mxu0 0.0
    %88 = vmatprep.subr.mxu0 0.0
    %89 = vmatpush2.msra.mxu0 0.0
    %90 = vmatprep.subr.mxu0 0.0
    %91 = vmatpush2.msra.mxu0 0.0
    %92 = vmatprep.subr.mxu0 0.0
    %93 = vmatpush2.msra.mxu0 0.0
    %94 = vmatprep.subr.mxu0 0.0
    %95 = vmatpush2.msra.mxu0 0.0
    %96 = vmatprep.subr.mxu0 0.0
    %97 = vmatpush2.msra.mxu0 0.0
    %98 = vmatprep.subr.mxu0 0.0
    %99 = vmatpush2.msra.mxu0 0.0
    %100 = vmatprep.subr.mxu0 0.0
    %101 = vmatpush2.msra.mxu0 0.0
    %102 = vmatprep.subr.mxu0 0.0
    %103 = vmatpush2.msra.mxu0 0.0
    %104 = vmatprep.subr.mxu0 0.0
    %105 = vmatpush2.msra.mxu0 0.0
    %106 = vmatprep.mubr.f32.mxu0 0.0
    %107 = vmatmul.mubr.f32.gmra.mxu0 %v40
    %v108 = vpop.f32.mrf.mxu0
    %v109 = vadd.f32 %v36, %v108
    %v110 = vpop.f32.mrf.mxu0
    %111 = vdwg.mxu0
    %vm112 = vcmp.ge.f32.partialorder %v109, 0.0
    %v113 = vmul.f32 %v109, 0.1
    %v114 = vsel %vm112, %v109, %v113
    %v115 = vld [vmem:[%s3] sm:$0xff]
    %v116 = vld [vmem:[%s3 + $0x8] sm:$0xff]
    %v117 = vld [vmem:[%s3 + $0x10] sm:$0xff]
    %v118 = vld [vmem:[%s3 + $0x18] sm:$0xff]
    %v119 = vld [vmem:[%s3 + $0x20] sm:$0xff]
    %v120 = vld [vmem:[%s3 + $0x28] sm:$0xff]
    %v121 = vld [vmem:[%s3 + $0x30] sm:$0xff]
    %v122 = vld [vmem:[%s3 + $0x38] sm:$0xff]
    %v123 = vld [vmem:[%s3 + $0x40] sm:$0xff]
    %v124 = vld [vmem:[%s3 + $0x48] sm:$0xff]
    %v125 = vld [vmem:[%s3 + $0x50] sm:$0xff]
    %v126 = vld [vmem:[%s3 + $0x58] sm:$0xff]
    %v127 = vld [vmem:[%s3 + $0x60] sm:$0xff]
    %v128 = vld [vmem:[%s3 + $0x68] sm:$0xff]
    %v129 = vld [vmem:[%s3 + $0x70] sm:$0xff]
    %v130 = vld [vmem:[%s3 + $0x78] sm:$0xff]
    %v131 = vld [vmem:[%s4] sm:$0x1]
    %v133 = vlaneseq
    %v134 = vshrl.u32 %v133, 7
    %v135 = vsub.s32 0, %v134
    %v136 = vrot.slane %v131, %v135
    %138 = vmatprep.subr.mxu0 0.0
    %139 = vmatpush1.msra.mxu0 %v130
    %140 = vmatprep.subr.mxu0 0.0
    %141 = vmatpush1.msra.mxu0 %v129
    %142 = vmatprep.subr.mxu0 0.0
    %143 = vmatpush1.msra.mxu0 %v128
    %144 = vmatprep.subr.mxu0 0.0
    %145 = vmatpush1.msra.mxu0 %v127
    %146 = vmatprep.subr.mxu0 0.0
    %147 = vmatpush1.msra.mxu0 %v126
    %148 = vmatprep.subr.mxu0 0.0
    %149 = vmatpush1.msra.mxu0 %v125
    %150 = vmatprep.subr.mxu0 0.0
    %151 = vmatpush1.msra.mxu0 %v124
    %152 = vmatprep.subr.mxu0 0.0
    %153 = vmatpush1.msra.mxu0 %v123
    %154 = vmatprep.subr.mxu0 0.0
    %155 = vmatpush1.msra.mxu0 %v122
    %156 = vmatprep.subr.mxu0 0.0
    %157 = vmatpush1.msra.mxu0 %v121
    %158 = vmatprep.subr.mxu0 0.0
    %159 = vmatpush1.msra.mxu0 %v120
    %160 = vmatprep.subr.mxu0 0.0
    %161 = vmatpush1.msra.mxu0 %v119
    %162 = vmatprep.subr.mxu0 0.0
    %163 = vmatpush1.msra.mxu0 %v118
    %164 = vmatprep.subr.mxu0 0.0
    %165 = vmatpush1.msra.mxu0 %v117
    %166 = vmatprep.subr.mxu0 0.0
    %167 = vmatpush1.msra.mxu0 %v116
    %168 = vmatprep.subr.mxu0 0.0
    %169 = vmatpush1.msra.mxu0 %v115
    %170 = vmatprep.subr.mxu0 0.0
    %171 = vmatpush2.msra.mxu0 0.0
    %172 = vmatprep.subr.mxu0 0.0
    %173 = vmatpush2.msra.mxu0 0.0
    %174 = vmatprep.subr.mxu0 0.0
    %175 = vmatpush2.msra.mxu0 0.0
    %176 = vmatprep.subr.mxu0 0.0
    %177 = vmatpush2.msra.mxu0 0.0
    %178 = vmatprep.subr.mxu0 0.0
    %179 = vmatpush2.msra.mxu0 0.0
    %180 = vmatprep.subr.mxu0 0.0
    %181 = vmatpush2.msra.mxu0 0.0
    %182 = vmatprep.subr.mxu0 0.0
    %183 = vmatpush2.msra.mxu0 0.0
    %184 = vmatprep.subr.mxu0 0.0
    %185 = vmatpush2.msra.mxu0 0.0
    %186 = vmatprep.subr.mxu0 0.0
    %187 = vmatpush2.msra.mxu0 0.0
    %188 = vmatprep.subr.mxu0 0.0
    %189 = vmatpush2.msra.mxu0 0.0
    %190 = vmatprep.subr.mxu0 0.0
    %191 = vmatpush2.msra.mxu0 0.0
    %192 = vmatprep.subr.mxu0 0.0
    %193 = vmatpush2.msra.mxu0 0.0
    %194 = vmatprep.subr.mxu0 0.0
    %195 = vmatpush2.msra.mxu0 0.0
    %196 = vmatprep.subr.mxu0 0.0
    %197 = vmatpush2.msra.mxu0 0.0
    %198 = vmatprep.subr.mxu0 0.0
    %199 = vmatpush2.msra.mxu0 0.0
    %200 = vmatprep.subr.mxu0 0.0
    %201 = vmatpush2.msra.mxu0 0.0
    %202 = vmatprep.mubr.f32.mxu0 0.0
    %203 = vmatmul.mubr.f32.gmra.mxu0 %v114
    %v204 = vpop.f32.mrf.mxu0
    %v205 = vadd.f32 %v136, %v204
    %v206 = vpop.f32.mrf.mxu0
    %207 = vdwg.mxu0
    %vm208 = vcmp.ge.f32.partialorder %v205, 0.0
    %v209 = vmul.f32 %v205, 0.1
    %v210 = vsel %vm208, %v205, %v209
    %v211 = vld [vmem:[%s5] sm:$0xff]
    %v212 = vld [vmem:[%s5 + $0x8] sm:$0xff]
    %v213 = vld [vmem:[%s5 + $0x10] sm:$0xff]
    %v214 = vld [vmem:[%s5 + $0x18] sm:$0xff]
    %v215 = vld [vmem:[%s5 + $0x20] sm:$0xff]
    %v216 = vld [vmem:[%s5 + $0x28] sm:$0xff]
    %v217 = vld [vmem:[%s5 + $0x30] sm:$0xff]
    %v218 = vld [vmem:[%s5 + $0x38] sm:$0xff]
    %v219 = vld [vmem:[%s5 + $0x40] sm:$0xff]
    %v220 = vld [vmem:[%s5 + $0x48] sm:$0xff]
    %v221 = vld [vmem:[%s5 + $0x50] sm:$0xff]
    %v222 = vld [vmem:[%s5 + $0x58] sm:$0xff]
    %v223 = vld [vmem:[%s5 + $0x60] sm:$0xff]
    %v224 = vld [vmem:[%s5 + $0x68] sm:$0xff]
    %v225 = vld [vmem:[%s5 + $0x70] sm:$0xff]
    %v226 = vld [vmem:[%s5 + $0x78] sm:$0xff]
    %v227 = vld [vmem:[%s6] sm:$0x1]
    %v229 = vlaneseq
    %v230 = vshrl.u32 %v229, 7
    %v231 = vsub.s32 0, %v230
    %v232 = vrot.slane %v227, %v231
    %234 = vmatprep.subr.mxu0 0.0
    %235 = vmatpush1.msra.mxu0 %v226
    %236 = vmatprep.subr.mxu0 0.0
    %237 = vmatpush1.msra.mxu0 %v225
    %238 = vmatprep.subr.mxu0 0.0
    %239 = vmatpush1.msra.mxu0 %v224
    %240 = vmatprep.subr.mxu0 0.0
    %241 = vmatpush1.msra.mxu0 %v223
    %242 = vmatprep.subr.mxu0 0.0
    %243 = vmatpush1.msra.mxu0 %v222
    %244 = vmatprep.subr.mxu0 0.0
    %245 = vmatpush1.msra.mxu0 %v221
    %246 = vmatprep.subr.mxu0 0.0
    %247 = vmatpush1.msra.mxu0 %v220
    %248 = vmatprep.subr.mxu0 0.0
    %249 = vmatpush1.msra.mxu0 %v219
    %250 = vmatprep.subr.mxu0 0.0
    %251 = vmatpush1.msra.mxu0 %v218
    %252 = vmatprep.subr.mxu0 0.0
    %253 = vmatpush1.msra.mxu0 %v217
    %254 = vmatprep.subr.mxu0 0.0
    %255 = vmatpush1.msra.mxu0 %v216
    %256 = vmatprep.subr.mxu0 0.0
    %257 = vmatpush1.msra.mxu0 %v215
    %258 = vmatprep.subr.mxu0 0.0
    %259 = vmatpush1.msra.mxu0 %v214
    %260 = vmatprep.subr.mxu0 0.0
    %261 = vmatpush1.msra.mxu0 %v213
    %262 = vmatprep.subr.mxu0 0.0
    %263 = vmatpush1.msra.mxu0 %v212
    %264 = vmatprep.subr.mxu0 0.0
    %265 = vmatpush1.msra.mxu0 %v211
    %266 = vmatprep.subr.mxu0 0.0
    %267 = vmatpush2.msra.mxu0 0.0
    %268 = vmatprep.subr.mxu0 0.0
    %269 = vmatpush2.msra.mxu0 0.0
    %270 = vmatprep.subr.mxu0 0.0
    %271 = vmatpush2.msra.mxu0 0.0
    %272 = vmatprep.subr.mxu0 0.0
    %273 = vmatpush2.msra.mxu0 0.0
    %274 = vmatprep.subr.mxu0 0.0
    %275 = vmatpush2.msra.mxu0 0.0
    %276 = vmatprep.subr.mxu0 0.0
    %277 = vmatpush2.msra.mxu0 0.0
    %278 = vmatprep.subr.mxu0 0.0
    %279 = vmatpush2.msra.mxu0 0.0
    %280 = vmatprep.subr.mxu0 0.0
    %281 = vmatpush2.msra.mxu0 0.0
    %282 = vmatprep.subr.mxu0 0.0
    %283 = vmatpush2.msra.mxu0 0.0
    %284 = vmatprep.subr.mxu0 0.0
    %285 = vmatpush2.msra.mxu0 0.0
    %286 = vmatprep.subr.mxu0 0.0
    %287 = vmatpush2.msra.mxu0 0.0
    %288 = vmatprep.subr.mxu0 0.0
    %289 = vmatpush2.msra.mxu0 0.0
    %290 = vmatprep.subr.mxu0 0.0
    %291 = vmatpush2.msra.mxu0 0.0
    %292 = vmatprep.subr.mxu0 0.0
    %293 = vmatpush2.msra.mxu0 0.0
    %294 = vmatprep.subr.mxu0 0.0
    %295 = vmatpush2.msra.mxu0 0.0
    %296 = vmatprep.subr.mxu0 0.0
    %297 = vmatpush2.msra.mxu0 0.0
    %298 = vmatprep.mubr.f32.mxu0 0.0
    %299 = vmatmul.mubr.f32.gmra.mxu0 %v210
    %v300 = vpop.f32.mrf.mxu0
    %v301 = vadd.f32 %v232, %v300
    %v302 = vpop.f32.mrf.mxu0
    %303 = vdwg.mxu0
    %v304 = vand.u32 2147483647, %v301
    %v305 = vsub.f32 0.0, %v304
    %v306 = vmul.f32 %v305, 1.442695
    %v307 = vpow.pop %v306
    %v308 = vadd.f32 %v307, 1.0
    %v309 = vrcp.pop %v308
    %vm310 = vcmp.ge.f32.partialorder %v301, 0.0
    %v311 = vmul.f32 %v307, %v309
    %v312 = vsel %vm310, %v309, %v311
    %v313 = vsub.f32 %v29, %v301
    %315 = vrot.lane.b32.xlu0 %v313, 8
    %v316 = vpop.permute.xlu0 %315
    %v318 = vmul.f32 %v312, %v316
    %320 = vrot.lane.b32.xlu0 %v318, 120
    %v321 = vpop.permute.xlu0 %320
    %v323 = vadd.f32 %v301, %v321
    %v324 = vadd.f32 %v312, 1e-08
    %v325 = vlog2.pop %v324
    %v326 = vmul.f32 %v325, 0.6931472
    %v327 = vadd.f32 %v326, 0.0
    %s328 = scalar_lea.vmem %s1, 8
    %v329 = vld [vmem:[%s328] sm:$0xff]
    %s330 = scalar_lea.vmem %s2, 1
    %v331 = vld [vmem:[%s330] sm:$0x1]
    %v333 = vlaneseq
    %v334 = vshrl.u32 %v333, 7
    %v335 = vsub.s32 0, %v334
    %v336 = vrot.slane %v331, %v335
    %v339 = vsel %vm38, %v323, 0
    %341 = vmatprep.subr.mxu0 0.0
    %342 = vmatpush1.msra.mxu0 0.0
    %343 = vmatprep.subr.mxu0 0.0
    %344 = vmatpush1.msra.mxu0 0.0
    %345 = vmatprep.subr.mxu0 0.0
    %346 = vmatpush1.msra.mxu0 0.0
    %347 = vmatprep.subr.mxu0 0.0
    %348 = vmatpush1.msra.mxu0 0.0
    %349 = vmatprep.subr.mxu0 0.0
    %350 = vmatpush1.msra.mxu0 0.0
    %351 = vmatprep.subr.mxu0 0.0
    %352 = vmatpush1.msra.mxu0 0.0
    %353 = vmatprep.subr.mxu0 0.0
    %354 = vmatpush1.msra.mxu0 0.0
    %355 = vmatprep.subr.mxu0 0.0
    %356 = vmatpush1.msra.mxu0 0.0
    %357 = vmatprep.subr.mxu0 0.0
    %358 = vmatpush1.msra.mxu0 0.0
    %359 = vmatprep.subr.mxu0 0.0
    %360 = vmatpush1.msra.mxu0 0.0
    %361 = vmatprep.subr.mxu0 0.0
    %362 = vmatpush1.msra.mxu0 0.0
    %363 = vmatprep.subr.mxu0 0.0
    %364 = vmatpush1.msra.mxu0 0.0
    %365 = vmatprep.subr.mxu0 0.0
    %366 = vmatpush1.msra.mxu0 0.0
    %367 = vmatprep.subr.mxu0 0.0
    %368 = vmatpush1.msra.mxu0 0.0
    %369 = vmatprep.subr.mxu0 0.0
    %370 = vmatpush1.msra.mxu0 0.0
    %371 = vmatprep.subr.mxu0 0.0
    %372 = vmatpush1.msra.mxu0 %v329
    %373 = vmatprep.subr.mxu0 0.0
    %374 = vmatpush2.msra.mxu0 0.0
    %375 = vmatprep.subr.mxu0 0.0
    %376 = vmatpush2.msra.mxu0 0.0
    %377 = vmatprep.subr.mxu0 0.0
    %378 = vmatpush2.msra.mxu0 0.0
    %379 = vmatprep.subr.mxu0 0.0
    %380 = vmatpush2.msra.mxu0 0.0
    %381 = vmatprep.subr.mxu0 0.0
    %382 = vmatpush2.msra.mxu0 0.0
    %383 = vmatprep.subr.mxu0 0.0
    %384 = vmatpush2.msra.mxu0 0.0
    %385 = vmatprep.subr.mxu0 0.0
    %386 = vmatpush2.msra.mxu0 0.0
    %387 = vmatprep.subr.mxu0 0.0
    %388 = vmatpush2.msra.mxu0 0.0
    %389 = vmatprep.subr.mxu0 0.0
    %390 = vmatpush2.msra.mxu0 0.0
    %391 = vmatprep.subr.mxu0 0.0
    %392 = vmatpush2.msra.mxu0 0.0
    %393 = vmatprep.subr.mxu0 0.0
    %394 = vmatpush2.msra.mxu0 0.0
    %395 = vmatprep.subr.mxu0 0.0
    %396 = vmatpush2.msra.mxu0 0.0
    %397 = vmatprep.subr.mxu0 0.0
    %398 = vmatpush2.msra.mxu0 0.0
    %399 = vmatprep.subr.mxu0 0.0
    %400 = vmatpush2.msra.mxu0 0.0
    %401 = vmatprep.subr.mxu0 0.0
    %402 = vmatpush2.msra.mxu0 0.0
    %403 = vmatprep.subr.mxu0 0.0
    %404 = vmatpush2.msra.mxu0 0.0
    %405 = vmatprep.mubr.f32.mxu0 0.0
    %406 = vmatmul.mubr.f32.gmra.mxu0 %v339
    %v407 = vpop.f32.mrf.mxu0
    %v408 = vadd.f32 %v336, %v407
    %v409 = vpop.f32.mrf.mxu0
    %410 = vdwg.mxu0
    %vm411 = vcmp.ge.f32.partialorder %v408, 0.0
    %v412 = vmul.f32 %v408, 0.1
    %v413 = vsel %vm411, %v408, %v412
    %s414 = scalar_lea.vmem %s3, 128
    %v415 = vld [vmem:[%s414] sm:$0xff]
    %v416 = vld [vmem:[%s414 + $0x8] sm:$0xff]
    %v417 = vld [vmem:[%s414 + $0x10] sm:$0xff]
    %v418 = vld [vmem:[%s414 + $0x18] sm:$0xff]
    %v419 = vld [vmem:[%s414 + $0x20] sm:$0xff]
    %v420 = vld [vmem:[%s414 + $0x28] sm:$0xff]
    %v421 = vld [vmem:[%s414 + $0x30] sm:$0xff]
    %v422 = vld [vmem:[%s414 + $0x38] sm:$0xff]
    %v423 = vld [vmem:[%s414 + $0x40] sm:$0xff]
    %v424 = vld [vmem:[%s414 + $0x48] sm:$0xff]
    %v425 = vld [vmem:[%s414 + $0x50] sm:$0xff]
    %v426 = vld [vmem:[%s414 + $0x58] sm:$0xff]
    %v427 = vld [vmem:[%s414 + $0x60] sm:$0xff]
    %v428 = vld [vmem:[%s414 + $0x68] sm:$0xff]
    %v429 = vld [vmem:[%s414 + $0x70] sm:$0xff]
    %v430 = vld [vmem:[%s414 + $0x78] sm:$0xff]
    %s431 = scalar_lea.vmem %s4, 1
    %v432 = vld [vmem:[%s431] sm:$0x1]
    %v434 = vlaneseq
    %v435 = vshrl.u32 %v434, 7
    %v436 = vsub.s32 0, %v435
    %v437 = vrot.slane %v432, %v436
    %439 = vmatprep.subr.mxu0 0.0
    %440 = vmatpush1.msra.mxu0 %v430
    %441 = vmatprep.subr.mxu0 0.0
    %442 = vmatpush1.msra.mxu0 %v429
    %443 = vmatprep.subr.mxu0 0.0
    %444 = vmatpush1.msra.mxu0 %v428
    %445 = vmatprep.subr.mxu0 0.0
    %446 = vmatpush1.msra.mxu0 %v427
    %447 = vmatprep.subr.mxu0 0.0
    %448 = vmatpush1.msra.mxu0 %v426
    %449 = vmatprep.subr.mxu0 0.0
    %450 = vmatpush1.msra.mxu0 %v425
    %451 = vmatprep.subr.mxu0 0.0
    %452 = vmatpush1.msra.mxu0 %v424
    %453 = vmatprep.subr.mxu0 0.0
    %454 = vmatpush1.msra.mxu0 %v423
    %455 = vmatprep.subr.mxu0 0.0
    %456 = vmatpush1.msra.mxu0 %v422
    %457 = vmatprep.subr.mxu0 0.0
    %458 = vmatpush1.msra.mxu0 %v421
    %459 = vmatprep.subr.mxu0 0.0
    %460 = vmatpush1.msra.mxu0 %v420
    %461 = vmatprep.subr.mxu0 0.0
    %462 = vmatpush1.msra.mxu0 %v419
    %463 = vmatprep.subr.mxu0 0.0
    %464 = vmatpush1.msra.mxu0 %v418
    %465 = vmatprep.subr.mxu0 0.0
    %466 = vmatpush1.msra.mxu0 %v417
    %467 = vmatprep.subr.mxu0 0.0
    %468 = vmatpush1.msra.mxu0 %v416
    %469 = vmatprep.subr.mxu0 0.0
    %470 = vmatpush1.msra.mxu0 %v415
    %471 = vmatprep.subr.mxu0 0.0
    %472 = vmatpush2.msra.mxu0 0.0
    %473 = vmatprep.subr.mxu0 0.0
    %474 = vmatpush2.msra.mxu0 0.0
    %475 = vmatprep.subr.mxu0 0.0
    %476 = vmatpush2.msra.mxu0 0.0
    %477 = vmatprep.subr.mxu0 0.0
    %478 = vmatpush2.msra.mxu0 0.0
    %479 = vmatprep.subr.mxu0 0.0
    %480 = vmatpush2.msra.mxu0 0.0
    %481 = vmatprep.subr.mxu0 0.0
    %482 = vmatpush2.msra.mxu0 0.0
    %483 = vmatprep.subr.mxu0 0.0
    %484 = vmatpush2.msra.mxu0 0.0
    %485 = vmatprep.subr.mxu0 0.0
    %486 = vmatpush2.msra.mxu0 0.0
    %487 = vmatprep.subr.mxu0 0.0
    %488 = vmatpush2.msra.mxu0 0.0
    %489 = vmatprep.subr.mxu0 0.0
    %490 = vmatpush2.msra.mxu0 0.0
    %491 = vmatprep.subr.mxu0 0.0
    %492 = vmatpush2.msra.mxu0 0.0
    %493 = vmatprep.subr.mxu0 0.0
    %494 = vmatpush2.msra.mxu0 0.0
    %495 = vmatprep.subr.mxu0 0.0
    %496 = vmatpush2.msra.mxu0 0.0
    %497 = vmatprep.subr.mxu0 0.0
    %498 = vmatpush2.msra.mxu0 0.0
    %499 = vmatprep.subr.mxu0 0.0
    %500 = vmatpush2.msra.mxu0 0.0
    %501 = vmatprep.subr.mxu0 0.0
    %502 = vmatpush2.msra.mxu0 0.0
    %503 = vmatprep.mubr.f32.mxu0 0.0
    %504 = vmatmul.mubr.f32.gmra.mxu0 %v413
    %v505 = vpop.f32.mrf.mxu0
    %v506 = vadd.f32 %v437, %v505
    %v507 = vpop.f32.mrf.mxu0
    %508 = vdwg.mxu0
    %vm509 = vcmp.ge.f32.partialorder %v506, 0.0
    %v510 = vmul.f32 %v506, 0.1
    %v511 = vsel %vm509, %v506, %v510
    %s512 = scalar_lea.vmem %s5, 128
    %v513 = vld [vmem:[%s512] sm:$0xff]
    %v514 = vld [vmem:[%s512 + $0x8] sm:$0xff]
    %v515 = vld [vmem:[%s512 + $0x10] sm:$0xff]
    %v516 = vld [vmem:[%s512 + $0x18] sm:$0xff]
    %v517 = vld [vmem:[%s512 + $0x20] sm:$0xff]
    %v518 = vld [vmem:[%s512 + $0x28] sm:$0xff]
    %v519 = vld [vmem:[%s512 + $0x30] sm:$0xff]
    %v520 = vld [vmem:[%s512 + $0x38] sm:$0xff]
    %v521 = vld [vmem:[%s512 + $0x40] sm:$0xff]
    %v522 = vld [vmem:[%s512 + $0x48] sm:$0xff]
    %v523 = vld [vmem:[%s512 + $0x50] sm:$0xff]
    %v524 = vld [vmem:[%s512 + $0x58] sm:$0xff]
    %v525 = vld [vmem:[%s512 + $0x60] sm:$0xff]
    %v526 = vld [vmem:[%s512 + $0x68] sm:$0xff]
    %v527 = vld [vmem:[%s512 + $0x70] sm:$0xff]
    %v528 = vld [vmem:[%s512 + $0x78] sm:$0xff]
    %s529 = scalar_lea.vmem %s6, 1
    %v530 = vld [vmem:[%s529] sm:$0x1]
    %v532 = vlaneseq
    %v533 = vshrl.u32 %v532, 7
    %v534 = vsub.s32 0, %v533
    %v535 = vrot.slane %v530, %v534
    %537 = vmatprep.subr.mxu0 0.0
    %538 = vmatpush1.msra.mxu0 %v528
    %539 = vmatprep.subr.mxu0 0.0
    %540 = vmatpush1.msra.mxu0 %v527
    %541 = vmatprep.subr.mxu0 0.0
    %542 = vmatpush1.msra.mxu0 %v526
    %543 = vmatprep.subr.mxu0 0.0
    %544 = vmatpush1.msra.mxu0 %v525
    %545 = vmatprep.subr.mxu0 0.0
    %546 = vmatpush1.msra.mxu0 %v524
    %547 = vmatprep.subr.mxu0 0.0
    %548 = vmatpush1.msra.mxu0 %v523
    %549 = vmatprep.subr.mxu0 0.0
    %550 = vmatpush1.msra.mxu0 %v522
    %551 = vmatprep.subr.mxu0 0.0
    %552 = vmatpush1.msra.mxu0 %v521
    %553 = vmatprep.subr.mxu0 0.0
    %554 = vmatpush1.msra.mxu0 %v520
    %555 = vmatprep.subr.mxu0 0.0
    %556 = vmatpush1.msra.mxu0 %v519
    %557 = vmatprep.subr.mxu0 0.0
    %558 = vmatpush1.msra.mxu0 %v518
    %559 = vmatprep.subr.mxu0 0.0
    %560 = vmatpush1.msra.mxu0 %v517
    %561 = vmatprep.subr.mxu0 0.0
    %562 = vmatpush1.msra.mxu0 %v516
    %563 = vmatprep.subr.mxu0 0.0
    %564 = vmatpush1.msra.mxu0 %v515
    %565 = vmatprep.subr.mxu0 0.0
    %566 = vmatpush1.msra.mxu0 %v514
    %567 = vmatprep.subr.mxu0 0.0
    %568 = vmatpush1.msra.mxu0 %v513
    %569 = vmatprep.subr.mxu0 0.0
    %570 = vmatpush2.msra.mxu0 0.0
    %571 = vmatprep.subr.mxu0 0.0
    %572 = vmatpush2.msra.mxu0 0.0
    %573 = vmatprep.subr.mxu0 0.0
    %574 = vmatpush2.msra.mxu0 0.0
    %575 = vmatprep.subr.mxu0 0.0
    %576 = vmatpush2.msra.mxu0 0.0
    %577 = vmatprep.subr.mxu0 0.0
    %578 = vmatpush2.msra.mxu0 0.0
    %579 = vmatprep.subr.mxu0 0.0
    %580 = vmatpush2.msra.mxu0 0.0
    %581 = vmatprep.subr.mxu0 0.0
    %582 = vmatpush2.msra.mxu0 0.0
    %583 = vmatprep.subr.mxu0 0.0
    %584 = vmatpush2.msra.mxu0 0.0
    %585 = vmatprep.subr.mxu0 0.0
    %586 = vmatpush2.msra.mxu0 0.0
    %587 = vmatprep.subr.mxu0 0.0
    %588 = vmatpush2.msra.mxu0 0.0
    %589 = vmatprep.subr.mxu0 0.0
    %590 = vmatpush2.msra.mxu0 0.0
    %591 = vmatprep.subr.mxu0 0.0
    %592 = vmatpush2.msra.mxu0 0.0
    %593 = vmatprep.subr.mxu0 0.0
    %594 = vmatpush2.msra.mxu0 0.0
    %595 = vmatprep.subr.mxu0 0.0
    %596 = vmatpush2.msra.mxu0 0.0
    %597 = vmatprep.subr.mxu0 0.0
    %598 = vmatpush2.msra.mxu0 0.0
    %599 = vmatprep.subr.mxu0 0.0
    %600 = vmatpush2.msra.mxu0 0.0
    %601 = vmatprep.mubr.f32.mxu0 0.0
    %602 = vmatmul.mubr.f32.gmra.mxu0 %v511
    %v603 = vpop.f32.mrf.mxu0
    %v604 = vadd.f32 %v535, %v603
    %v605 = vpop.f32.mrf.mxu0
    %606 = vdwg.mxu0
    %v607 = vand.u32 2147483647, %v604
    %v608 = vsub.f32 0.0, %v607
    %v609 = vmul.f32 %v608, 1.442695
    %v610 = vpow.pop %v609
    %v611 = vadd.f32 %v610, 1.0
    %v612 = vrcp.pop %v611
    %vm613 = vcmp.ge.f32.partialorder %v604, 0.0
    %v614 = vmul.f32 %v610, %v612
    %v615 = vsel %vm613, %v612, %v614
    %v616 = vsub.f32 %v323, %v604
    %618 = vrot.lane.b32.xlu0 %v616, 8
    %v619 = vpop.permute.xlu0 %618
    %v621 = vmul.f32 %v615, %v619
    %623 = vrot.lane.b32.xlu0 %v621, 120
    %v624 = vpop.permute.xlu0 %623
    %v626 = vadd.f32 %v604, %v624
    %v627 = vadd.f32 %v615, 1e-08
    %v628 = vlog2.pop %v627
    %v629 = vmul.f32 %v628, 0.6931472
    %v630 = vadd.f32 %v327, %v629
    %s631 = scalar_lea.vmem %s1, 16
    %v632 = vld [vmem:[%s631] sm:$0xff]
    %s633 = scalar_lea.vmem %s2, 2
    %v634 = vld [vmem:[%s633] sm:$0x1]
    %v636 = vlaneseq
    %v637 = vshrl.u32 %v636, 7
    %v638 = vsub.s32 0, %v637
    %v639 = vrot.slane %v634, %v638
    %v642 = vsel %vm38, %v626, 0
    %644 = vmatprep.subr.mxu0 0.0
    %645 = vmatpush1.msra.mxu0 0.0
    %646 = vmatprep.subr.mxu0 0.0
    %647 = vmatpush1.msra.mxu0 0.0
    %648 = vmatprep.subr.mxu0 0.0
    %649 = vmatpush1.msra.mxu0 0.0
    %650 = vmatprep.subr.mxu0 0.0
    %651 = vmatpush1.msra.mxu0 0.0
    %652 = vmatprep.subr.mxu0 0.0
    %653 = vmatpush1.msra.mxu0 0.0
    %654 = vmatprep.subr.mxu0 0.0
    %655 = vmatpush1.msra.mxu0 0.0
    %656 = vmatprep.subr.mxu0 0.0
    %657 = vmatpush1.msra.mxu0 0.0
    %658 = vmatprep.subr.mxu0 0.0
    %659 = vmatpush1.msra.mxu0 0.0
    %660 = vmatprep.subr.mxu0 0.0
    %661 = vmatpush1.msra.mxu0 0.0
    %662 = vmatprep.subr.mxu0 0.0
    %663 = vmatpush1.msra.mxu0 0.0
    %664 = vmatprep.subr.mxu0 0.0
    %665 = vmatpush1.msra.mxu0 0.0
    %666 = vmatprep.subr.mxu0 0.0
    %667 = vmatpush1.msra.mxu0 0.0
    %668 = vmatprep.subr.mxu0 0.0
    %669 = vmatpush1.msra.mxu0 0.0
    %670 = vmatprep.subr.mxu0 0.0
    %671 = vmatpush1.msra.mxu0 0.0
    %672 = vmatprep.subr.mxu0 0.0
    %673 = vmatpush1.msra.mxu0 0.0
    %674 = vmatprep.subr.mxu0 0.0
    %675 = vmatpush1.msra.mxu0 %v632
    %676 = vmatprep.subr.mxu0 0.0
    %677 = vmatpush2.msra.mxu0 0.0
    %678 = vmatprep.subr.mxu0 0.0
    %679 = vmatpush2.msra.mxu0 0.0
    %680 = vmatprep.subr.mxu0 0.0
    %681 = vmatpush2.msra.mxu0 0.0
    %682 = vmatprep.subr.mxu0 0.0
    %683 = vmatpush2.msra.mxu0 0.0
    %684 = vmatprep.subr.mxu0 0.0
    %685 = vmatpush2.msra.mxu0 0.0
    %686 = vmatprep.subr.mxu0 0.0
    %687 = vmatpush2.msra.mxu0 0.0
    %688 = vmatprep.subr.mxu0 0.0
    %689 = vmatpush2.msra.mxu0 0.0
    %690 = vmatprep.subr.mxu0 0.0
    %691 = vmatpush2.msra.mxu0 0.0
    %692 = vmatprep.subr.mxu0 0.0
    %693 = vmatpush2.msra.mxu0 0.0
    %694 = vmatprep.subr.mxu0 0.0
    %695 = vmatpush2.msra.mxu0 0.0
    %696 = vmatprep.subr.mxu0 0.0
    %697 = vmatpush2.msra.mxu0 0.0
    %698 = vmatprep.subr.mxu0 0.0
    %699 = vmatpush2.msra.mxu0 0.0
    %700 = vmatprep.subr.mxu0 0.0
    %701 = vmatpush2.msra.mxu0 0.0
    %702 = vmatprep.subr.mxu0 0.0
    %703 = vmatpush2.msra.mxu0 0.0
    %704 = vmatprep.subr.mxu0 0.0
    %705 = vmatpush2.msra.mxu0 0.0
    %706 = vmatprep.subr.mxu0 0.0
    %707 = vmatpush2.msra.mxu0 0.0
    %708 = vmatprep.mubr.f32.mxu0 0.0
    %709 = vmatmul.mubr.f32.gmra.mxu0 %v642
    %v710 = vpop.f32.mrf.mxu0
    %v711 = vadd.f32 %v639, %v710
    %v712 = vpop.f32.mrf.mxu0
    %713 = vdwg.mxu0
    %vm714 = vcmp.ge.f32.partialorder %v711, 0.0
    %v715 = vmul.f32 %v711, 0.1
    %v716 = vsel %vm714, %v711, %v715
    %s717 = scalar_lea.vmem %s3, 256
    %v718 = vld [vmem:[%s717] sm:$0xff]
    %v719 = vld [vmem:[%s717 + $0x8] sm:$0xff]
    %v720 = vld [vmem:[%s717 + $0x10] sm:$0xff]
    %v721 = vld [vmem:[%s717 + $0x18] sm:$0xff]
    %v722 = vld [vmem:[%s717 + $0x20] sm:$0xff]
    %v723 = vld [vmem:[%s717 + $0x28] sm:$0xff]
    %v724 = vld [vmem:[%s717 + $0x30] sm:$0xff]
    %v725 = vld [vmem:[%s717 + $0x38] sm:$0xff]
    %v726 = vld [vmem:[%s717 + $0x40] sm:$0xff]
    %v727 = vld [vmem:[%s717 + $0x48] sm:$0xff]
    %v728 = vld [vmem:[%s717 + $0x50] sm:$0xff]
    %v729 = vld [vmem:[%s717 + $0x58] sm:$0xff]
    %v730 = vld [vmem:[%s717 + $0x60] sm:$0xff]
    %v731 = vld [vmem:[%s717 + $0x68] sm:$0xff]
    %v732 = vld [vmem:[%s717 + $0x70] sm:$0xff]
    %v733 = vld [vmem:[%s717 + $0x78] sm:$0xff]
    %s734 = scalar_lea.vmem %s4, 2
    %v735 = vld [vmem:[%s734] sm:$0x1]
    %v737 = vlaneseq
    %v738 = vshrl.u32 %v737, 7
    %v739 = vsub.s32 0, %v738
    %v740 = vrot.slane %v735, %v739
    %742 = vmatprep.subr.mxu0 0.0
    %743 = vmatpush1.msra.mxu0 %v733
    %744 = vmatprep.subr.mxu0 0.0
    %745 = vmatpush1.msra.mxu0 %v732
    %746 = vmatprep.subr.mxu0 0.0
    %747 = vmatpush1.msra.mxu0 %v731
    %748 = vmatprep.subr.mxu0 0.0
    %749 = vmatpush1.msra.mxu0 %v730
    %750 = vmatprep.subr.mxu0 0.0
    %751 = vmatpush1.msra.mxu0 %v729
    %752 = vmatprep.subr.mxu0 0.0
    %753 = vmatpush1.msra.mxu0 %v728
    %754 = vmatprep.subr.mxu0 0.0
    %755 = vmatpush1.msra.mxu0 %v727
    %756 = vmatprep.subr.mxu0 0.0
    %757 = vmatpush1.msra.mxu0 %v726
    %758 = vmatprep.subr.mxu0 0.0
    %759 = vmatpush1.msra.mxu0 %v725
    %760 = vmatprep.subr.mxu0 0.0
    %761 = vmatpush1.msra.mxu0 %v724
    %762 = vmatprep.subr.mxu0 0.0
    %763 = vmatpush1.msra.mxu0 %v723
    %764 = vmatprep.subr.mxu0 0.0
    %765 = vmatpush1.msra.mxu0 %v722
    %766 = vmatprep.subr.mxu0 0.0
    %767 = vmatpush1.msra.mxu0 %v721
    %768 = vmatprep.subr.mxu0 0.0
    %769 = vmatpush1.msra.mxu0 %v720
    %770 = vmatprep.subr.mxu0 0.0
    %771 = vmatpush1.msra.mxu0 %v719
    %772 = vmatprep.subr.mxu0 0.0
    %773 = vmatpush1.msra.mxu0 %v718
    %774 = vmatprep.subr.mxu0 0.0
    %775 = vmatpush2.msra.mxu0 0.0
    %776 = vmatprep.subr.mxu0 0.0
    %777 = vmatpush2.msra.mxu0 0.0
    %778 = vmatprep.subr.mxu0 0.0
    %779 = vmatpush2.msra.mxu0 0.0
    %780 = vmatprep.subr.mxu0 0.0
    %781 = vmatpush2.msra.mxu0 0.0
    %782 = vmatprep.subr.mxu0 0.0
    %783 = vmatpush2.msra.mxu0 0.0
    %784 = vmatprep.subr.mxu0 0.0
    %785 = vmatpush2.msra.mxu0 0.0
    %786 = vmatprep.subr.mxu0 0.0
    %787 = vmatpush2.msra.mxu0 0.0
    %788 = vmatprep.subr.mxu0 0.0
    %789 = vmatpush2.msra.mxu0 0.0
    %790 = vmatprep.subr.mxu0 0.0
    %791 = vmatpush2.msra.mxu0 0.0
    %792 = vmatprep.subr.mxu0 0.0
    %793 = vmatpush2.msra.mxu0 0.0
    %794 = vmatprep.subr.mxu0 0.0
    %795 = vmatpush2.msra.mxu0 0.0
    %796 = vmatprep.subr.mxu0 0.0
    %797 = vmatpush2.msra.mxu0 0.0
    %798 = vmatprep.subr.mxu0 0.0
    %799 = vmatpush2.msra.mxu0 0.0
    %800 = vmatprep.subr.mxu0 0.0
    %801 = vmatpush2.msra.mxu0 0.0
    %802 = vmatprep.subr.mxu0 0.0
    %803 = vmatpush2.msra.mxu0 0.0
    %804 = vmatprep.subr.mxu0 0.0
    %805 = vmatpush2.msra.mxu0 0.0
    %806 = vmatprep.mubr.f32.mxu0 0.0
    %807 = vmatmul.mubr.f32.gmra.mxu0 %v716
    %v808 = vpop.f32.mrf.mxu0
    %v809 = vadd.f32 %v740, %v808
    %v810 = vpop.f32.mrf.mxu0
    %811 = vdwg.mxu0
    %vm812 = vcmp.ge.f32.partialorder %v809, 0.0
    %v813 = vmul.f32 %v809, 0.1
    %v814 = vsel %vm812, %v809, %v813
    %s815 = scalar_lea.vmem %s5, 256
    %v816 = vld [vmem:[%s815] sm:$0xff]
    %v817 = vld [vmem:[%s815 + $0x8] sm:$0xff]
    %v818 = vld [vmem:[%s815 + $0x10] sm:$0xff]
    %v819 = vld [vmem:[%s815 + $0x18] sm:$0xff]
    %v820 = vld [vmem:[%s815 + $0x20] sm:$0xff]
    %v821 = vld [vmem:[%s815 + $0x28] sm:$0xff]
    %v822 = vld [vmem:[%s815 + $0x30] sm:$0xff]
    %v823 = vld [vmem:[%s815 + $0x38] sm:$0xff]
    %v824 = vld [vmem:[%s815 + $0x40] sm:$0xff]
    %v825 = vld [vmem:[%s815 + $0x48] sm:$0xff]
    %v826 = vld [vmem:[%s815 + $0x50] sm:$0xff]
    %v827 = vld [vmem:[%s815 + $0x58] sm:$0xff]
    %v828 = vld [vmem:[%s815 + $0x60] sm:$0xff]
    %v829 = vld [vmem:[%s815 + $0x68] sm:$0xff]
    %v830 = vld [vmem:[%s815 + $0x70] sm:$0xff]
    %v831 = vld [vmem:[%s815 + $0x78] sm:$0xff]
    %s832 = scalar_lea.vmem %s6, 2
    %v833 = vld [vmem:[%s832] sm:$0x1]
    %v835 = vlaneseq
    %v836 = vshrl.u32 %v835, 7
    %v837 = vsub.s32 0, %v836
    %v838 = vrot.slane %v833, %v837
    %840 = vmatprep.subr.mxu0 0.0
    %841 = vmatpush1.msra.mxu0 %v831
    %842 = vmatprep.subr.mxu0 0.0
    %843 = vmatpush1.msra.mxu0 %v830
    %844 = vmatprep.subr.mxu0 0.0
    %845 = vmatpush1.msra.mxu0 %v829
    %846 = vmatprep.subr.mxu0 0.0
    %847 = vmatpush1.msra.mxu0 %v828
    %848 = vmatprep.subr.mxu0 0.0
    %849 = vmatpush1.msra.mxu0 %v827
    %850 = vmatprep.subr.mxu0 0.0
    %851 = vmatpush1.msra.mxu0 %v826
    %852 = vmatprep.subr.mxu0 0.0
    %853 = vmatpush1.msra.mxu0 %v825
    %854 = vmatprep.subr.mxu0 0.0
    %855 = vmatpush1.msra.mxu0 %v824
    %856 = vmatprep.subr.mxu0 0.0
    %857 = vmatpush1.msra.mxu0 %v823
    %858 = vmatprep.subr.mxu0 0.0
    %859 = vmatpush1.msra.mxu0 %v822
    %860 = vmatprep.subr.mxu0 0.0
    %861 = vmatpush1.msra.mxu0 %v821
    %862 = vmatprep.subr.mxu0 0.0
    %863 = vmatpush1.msra.mxu0 %v820
    %864 = vmatprep.subr.mxu0 0.0
    %865 = vmatpush1.msra.mxu0 %v819
    %866 = vmatprep.subr.mxu0 0.0
    %867 = vmatpush1.msra.mxu0 %v818
    %868 = vmatprep.subr.mxu0 0.0
    %869 = vmatpush1.msra.mxu0 %v817
    %870 = vmatprep.subr.mxu0 0.0
    %871 = vmatpush1.msra.mxu0 %v816
    %872 = vmatprep.subr.mxu0 0.0
    %873 = vmatpush2.msra.mxu0 0.0
    %874 = vmatprep.subr.mxu0 0.0
    %875 = vmatpush2.msra.mxu0 0.0
    %876 = vmatprep.subr.mxu0 0.0
    %877 = vmatpush2.msra.mxu0 0.0
    %878 = vmatprep.subr.mxu0 0.0
    %879 = vmatpush2.msra.mxu0 0.0
    %880 = vmatprep.subr.mxu0 0.0
    %881 = vmatpush2.msra.mxu0 0.0
    %882 = vmatprep.subr.mxu0 0.0
    %883 = vmatpush2.msra.mxu0 0.0
    %884 = vmatprep.subr.mxu0 0.0
    %885 = vmatpush2.msra.mxu0 0.0
    %886 = vmatprep.subr.mxu0 0.0
    %887 = vmatpush2.msra.mxu0 0.0
    %888 = vmatprep.subr.mxu0 0.0
    %889 = vmatpush2.msra.mxu0 0.0
    %890 = vmatprep.subr.mxu0 0.0
    %891 = vmatpush2.msra.mxu0 0.0
    %892 = vmatprep.subr.mxu0 0.0
    %893 = vmatpush2.msra.mxu0 0.0
    %894 = vmatprep.subr.mxu0 0.0
    %895 = vmatpush2.msra.mxu0 0.0
    %896 = vmatprep.subr.mxu0 0.0
    %897 = vmatpush2.msra.mxu0 0.0
    %898 = vmatprep.subr.mxu0 0.0
    %899 = vmatpush2.msra.mxu0 0.0
    %900 = vmatprep.subr.mxu0 0.0
    %901 = vmatpush2.msra.mxu0 0.0
    %902 = vmatprep.subr.mxu0 0.0
    %903 = vmatpush2.msra.mxu0 0.0
    %904 = vmatprep.mubr.f32.mxu0 0.0
    %905 = vmatmul.mubr.f32.gmra.mxu0 %v814
    %v906 = vpop.f32.mrf.mxu0
    %v907 = vadd.f32 %v838, %v906
    %v908 = vpop.f32.mrf.mxu0
    %909 = vdwg.mxu0
    %v910 = vand.u32 2147483647, %v907
    %v911 = vsub.f32 0.0, %v910
    %v912 = vmul.f32 %v911, 1.442695
    %v913 = vpow.pop %v912
    %v914 = vadd.f32 %v913, 1.0
    %v915 = vrcp.pop %v914
    %vm916 = vcmp.ge.f32.partialorder %v907, 0.0
    %v917 = vmul.f32 %v913, %v915
    %v918 = vsel %vm916, %v915, %v917
    %v919 = vsub.f32 %v626, %v907
    %921 = vrot.lane.b32.xlu0 %v919, 8
    %v922 = vpop.permute.xlu0 %921
    %v924 = vmul.f32 %v918, %v922
    %926 = vrot.lane.b32.xlu0 %v924, 120
    %v927 = vpop.permute.xlu0 %926
    %v929 = vadd.f32 %v907, %v927
    %v930 = vadd.f32 %v918, 1e-08
    %v931 = vlog2.pop %v930
    %v932 = vmul.f32 %v931, 0.6931472
    %v933 = vadd.f32 %v630, %v932
    %934 = vst.msk [vmem:[#allocation2] sm:$0xff] %vm38, %v929
    %936 = vrot.lane.b32.xlu0 %v933, 120
    %v937 = vpop.permute.xlu0 %936
    %v939 = vsel %vm38, %v937, 0.0
    %940 = vadd.xlane.f32.xlu0 %v939
    %v941 = vpop.xlane.xlu0 %940
    %vm942 = vcmask 7168
    %943 = vst.msk [vmem:[%s8] sm:$0xff] %vm942, %v941
    // Predicated region
    $region30: #{tpu_custom_call.1} parent=1 // pred_check
      _
    $region31: #{tpu_custom_call.1} parent=1 // pred_check_branch
      %945 = sbr.rel (0) target = $region33
    $region32: #{tpu_custom_call.1} parent=1 // pred_region
      %s947 = ssub.s32 128, 128
      %948 = vsyncadd [#allocation3], %s947
      %s950 = sshll.u32 [#allocation2], 4
      %s951 = int_to_ptr.vmem [resolvable:$true] %s950
      %953 = dma.vmem_to_hbm [thread:$0]  %s951, 128, %s7, [#allocation3]
    $region33: #{tpu_custom_call.1} parent=1 // pred_fallthru
      _
    // Predicated region
    $region34: #{tpu_custom_call.1} parent=1 // pred_check
      _
    $region35: #{tpu_custom_call.1} parent=1 // pred_check_branch
      %955 = sbr.rel (0) target = $region37
    $region36: #{tpu_custom_call.1} parent=1 // pred_region
      _
    $region37: #{tpu_custom_call.1} parent=1 // pred_fallthru
      _
    // Predicated region
    $region38: #{tpu_custom_call.1} parent=1 // pred_check
      _
    $region39: #{tpu_custom_call.1} parent=1 // pred_check_branch
      %957 = sbr.rel (0) target = $region41
    $region40: #{tpu_custom_call.1} parent=1 // pred_region
      %958 = dma.done [#allocation3], 128
    $region41: #{tpu_custom_call.1} parent=1 // pred_fallthru
      _
    // Predicated region
    $region42: #{tpu_custom_call.1} parent=1 // pred_check
      _
    $region43: #{tpu_custom_call.1} parent=1 // pred_check_branch
      %960 = sbr.rel (0) target = $region45
    $region44: #{tpu_custom_call.1} parent=1 // pred_region
      _
    $region45: #{tpu_custom_call.1} parent=1 // pred_fallthru
      _
    %961 = vsyncpa [#allocation3], 1

</llo_original>
